<compile_context>
chip_gen: v7x
topology: tpu7x:2x2x1
jax: 0.10.0
libtpu: 0.0.40
codegen_flags: <defaults>
</compile_context>

<pallas_src>
import functools

import jax
import jax.numpy as jnp
from jax.experimental import pallas as pl
from jax.experimental.pallas import tpu as pltpu

LOGSTD_CLIP_L = -20.0
LOGSTD_CLIP_U = 2.0


# --------------------------------------------------------------------------
# Kernel
# --------------------------------------------------------------------------
def _actor_kernel(mode, state_ref, *rest):
    """mode: 'sample' (extra = eps ~ N(0,1)), 'real' (extra = real_action),
    'eval' (no extra input at all)."""
    if mode == "eval":
        extra_ref = None
        (w1_ref, b1_ref, w2_ref, b2_ref, w3_ref, b3_ref,
         w4_ref, b4_ref, out_ref) = rest
    else:
        (extra_ref, w1_ref, b1_ref, w2_ref, b2_ref, w3_ref, b3_ref,
         w4_ref, b4_ref, out_ref) = rest

    x = state_ref[...]

    h = jnp.maximum(
        jnp.dot(x, w1_ref[...], preferred_element_type=jnp.float32)
        + b1_ref[...], 0.0)
    h = jnp.maximum(
        jnp.dot(h, w2_ref[...], preferred_element_type=jnp.float32)
        + b2_ref[...], 0.0)
    h = jnp.maximum(
        jnp.dot(h, w3_ref[...], preferred_element_type=jnp.float32)
        + b3_ref[...], 0.0)

    # Single fused head matmul -> [B, 2*A_pad]; chunk(2, dim=1) is a
    # lane-aligned slice (A_pad is a multiple of 128).
    y = jnp.dot(h, w4_ref[...], preferred_element_type=jnp.float32) + b4_ref[...]
    a_pad = y.shape[-1] // 2
    mu = y[:, :a_pad]
    logstd = jnp.clip(y[:, a_pad:], LOGSTD_CLIP_L, LOGSTD_CLIP_U)
    mean = jnp.tanh(mu)

    if mode == "eval":
        action = mean
    elif mode == "real":
        # Forward value == real_action; the /std then *std round-trip only
        # matters for autodiff (detach), which this kernel does not compute.
        action = mean + (extra_ref[...] - mean)
    else:  # "sample": rsample of TransformedDistribution(Normal(mu,std), Tanh)
        std = jnp.exp(logstd)
        action = jnp.tanh(mu + std * extra_ref[...])

    out_ref[...] = action.astype(out_ref.dtype)


# --------------------------------------------------------------------------
# Parameter handling
# --------------------------------------------------------------------------
def _round_up(n, m):
    return ((n + m - 1) // m) * m


def _pad2(x, rows, cols):
    r, c = x.shape
    return jnp.pad(x, ((0, rows - r), (0, cols - c)))


def init_params(key, state_dim, action_dim, hidden_dim):
    """Synthetic init (uniform +-1/sqrt(fan_in), like torch Linear).
    Returns raw (unpadded) params; w4/b4 are the fused [H, 2A] head."""
    def linear(k, fan_in, fan_out):
        kw, kb = jax.random.split(k)
        lim = 1.0 / jnp.sqrt(jnp.float32(fan_in))
        w = jax.random.uniform(kw, (fan_in, fan_out), jnp.float32, -lim, lim)
        b = jax.random.uniform(kb, (1, fan_out), jnp.float32, -lim, lim)
        return w, b

    k1, k2, k3, k4 = jax.random.split(key, 4)
    w1, b1 = linear(k1, state_dim, hidden_dim)
    w2, b2 = linear(k2, hidden_dim, hidden_dim)
    w3, b3 = linear(k3, hidden_dim, hidden_dim)
    w4, b4 = linear(k4, hidden_dim, 2 * action_dim)
    return (w1, b1, w2, b2, w3, b3, w4, b4)


def pad_params(params):
    """Zero-pad all feature dims to multiples of 128 lanes. The mu and logstd
    column groups of l4 are padded independently so the in-kernel split stays
    lane-aligned at A_pad."""
    w1, b1, w2, b2, w3, b3, w4, b4 = params
    S, H = w1.shape
    A = w4.shape[1] // 2
    Sp, Hp, Ap = _round_up(S, 128), _round_up(H, 128), _round_up(A, 128)

    w1p, b1p = _pad2(w1, Sp, Hp), _pad2(b1, 1, Hp)
    w2p, b2p = _pad2(w2, Hp, Hp), _pad2(b2, 1, Hp)
    w3p, b3p = _pad2(w3, Hp, Hp), _pad2(b3, 1, Hp)

    w4p = jnp.zeros((Hp, 2 * Ap), w4.dtype)
    w4p = w4p.at[:H, :A].set(w4[:, :A]).at[:H, Ap:Ap + A].set(w4[:, A:])
    b4p = jnp.zeros((1, 2 * Ap), b4.dtype)
    b4p = b4p.at[:, :A].set(b4[:, :A]).at[:, Ap:Ap + A].set(b4[:, A:])

    padded = (w1p, b1p, w2p, b2p, w3p, b3p, w4p, b4p)
    dims = (S, H, A, Sp, Hp, Ap)
    return padded, dims


# --------------------------------------------------------------------------
# Wrapper
# --------------------------------------------------------------------------
def svg_actor_forward(state, padded_params, dims, mode="sample",
                      real_action=None, eps=None, batch_tile=256):
    """Pallas implementation of SVG_Actor.forward.

    mode='sample' -> needs eps [B, A] (standard normal noise)
    mode='real'   -> needs real_action [B, A]
    mode='eval'   -> deterministic tanh(mu)
    """
    (w1, b1, w2, b2, w3, b3, w4, b4) = padded_params
    S, H, A, Sp, Hp, Ap = dims
    B = state.shape[0]
    assert batch_tile % 8 == 0

    if mode == "sample":
        assert eps is not None
        extra = eps
    elif mode == "real":
        assert real_action is not None
        extra = real_action
    elif mode == "eval":
        extra = None
    else:
        raise ValueError(f"unknown mode {mode!r}")

    use_grid = B > batch_tile
    if use_grid:
        tb = batch_tile
        Bp = _round_up(B, tb)
    else:
        Bp = _round_up(B, 8)

    state_p = _pad2(state.astype(jnp.float32), Bp, Sp)
    args = [state_p]
    if extra is not None:
        args.append(_pad2(extra.astype(jnp.float32), Bp, Ap))
    args += [w1, b1, w2, b2, w3, b3, w4, b4]

    kernel = functools.partial(_actor_kernel, mode)
    out_shape = jax.ShapeDtypeStruct((Bp, Ap), jnp.float32)

    if not use_grid:
        # Grid-less: whole (padded) arrays resident in VMEM, single invocation.
        vmem = pl.BlockSpec(memory_space=pltpu.MemorySpace.VMEM)
        out_p = pl.pallas_call(
            kernel,
            out_shape=out_shape,
            in_specs=[vmem] * len(args),
            out_specs=vmem,
        )(*args)
    else:
        # Batch-tiled: state/extra/out stream through in TB-row tiles; the
        # weights/biases stay VMEM-resident (index_map always returns (0, 0)).
        def batch_spec(cols):
            return pl.BlockSpec((tb, cols), lambda i: (i, 0))

        def pinned(shape):
            return pl.BlockSpec(shape, lambda i: (0, 0))

        in_specs = [batch_spec(Sp)]
        if extra is not None:
            in_specs.append(batch_spec(Ap))
        in_specs += [pinned(w1.shape), pinned(b1.shape),
                     pinned(w2.shape), pinned(b2.shape),
                     pinned(w3.shape), pinned(b3.shape),
                     pinned(w4.shape), pinned(b4.shape)]

        out_p = pl.pallas_call(
            kernel,
            out_shape=out_shape,
            grid=(Bp // tb,),
            in_specs=in_specs,
            out_specs=batch_spec(Ap),
            compiler_params=pltpu.CompilerParams(
                dimension_semantics=("parallel",)),
        )(*args)

    return out_p[:B, :A]


# --------------------------------------------------------------------------
# Pure-JAX reference (matches the torch module op-for-op)
# --------------------------------------------------------------------------
def _reference_forward(state, params, mode, real_action=None, eps=None):
    w1, b1, w2, b2, w3, b3, w4, b4 = params
    h1 = jax.nn.relu(state @ w1 + b1)
    h2 = jax.nn.relu(h1 @ w2 + b2)
    h3 = jax.nn.relu(h2 @ w3 + b3)
    y = h3 @ w4 + b4
    A = y.shape[1] // 2
    mu, logstd = y[:, :A], y[:, A:]
    logstd = jnp.clip(logstd, LOGSTD_CLIP_L, LOGSTD_CLIP_U)
    std = jnp.exp(logstd)
    mean = jnp.tanh(mu)
    if mode == "eval":
        return mean
    if mode == "real":
        return mean + std * ((real_action - mean) / std)
    return jnp.tanh(mu + std * eps)


# --------------------------------------------------------------------------
if __name__ == "__main__":
    B, STATE_DIM, ACTION_DIM, HIDDEN_DIM = 8, 16, 8, 32

    root = jax.random.PRNGKey(0)
    k_param, k_state, k_eps, k_real, k_big = jax.random.split(root, 5)

    raw_params = init_params(k_param, STATE_DIM, ACTION_DIM, HIDDEN_DIM)
    padded_params, dims = pad_params(raw_params)

    state = jax.random.normal(k_state, (B, STATE_DIM), jnp.float32)
    eps = jax.random.normal(k_eps, (B, ACTION_DIM), jnp.float32)
    real_action = jnp.tanh(jax.random.normal(k_real, (B, ACTION_DIM), jnp.float32))

    # small-batch (grid-less) paths: sample / eval / real
    a_sample = jax.block_until_ready(
        svg_actor_forward(state, padded_params, dims, mode="sample", eps=eps))
    a_eval = jax.block_until_ready(
        svg_actor_forward(state, padded_params, dims, mode="eval"))
    a_real = jax.block_until_ready(
        svg_actor_forward(state, padded_params, dims, mode="real",
                          real_action=real_action))

    ref_sample = _reference_forward(state, raw_params, "sample", eps=eps)
    ref_eval = _reference_forward(state, raw_params, "eval")
    ref_real = _reference_forward(state, raw_params, "real",
                                  real_action=real_action)

    assert a_sample.shape == (B, ACTION_DIM)
    assert jnp.allclose(a_sample, ref_sample, atol=1e-5, rtol=1e-5)
    assert jnp.allclose(a_eval, ref_eval, atol=1e-5, rtol=1e-5)
    assert jnp.allclose(a_real, ref_real, atol=1e-5, rtol=1e-5)

    # large, non-aligned batch exercises the batch-tiled (gridded) path
    B2 = 300
    kb1, kb2 = jax.random.split(k_big)
    state2 = jax.random.normal(kb1, (B2, STATE_DIM), jnp.float32)
    eps2 = jax.random.normal(kb2, (B2, ACTION_DIM), jnp.float32)
    a2 = jax.block_until_ready(
        svg_actor_forward(state2, padded_params, dims, mode="sample",
                          eps=eps2, batch_tile=128))
    ref2 = _reference_forward(state2, raw_params, "sample", eps=eps2)
    assert a2.shape == (B2, ACTION_DIM)
    assert jnp.allclose(a2, ref2, atol=1e-5, rtol=1e-5)

    print("KERNEL_OK")
</pallas_src>

<mosaic_0001>
module attributes {stable_mosaic.version = 11 : i64} {
  func.func @_actor_kernel(%arg0: memref<8x128xf32, #tpu.memory_space<vmem>>, %arg1: memref<8x128xf32, #tpu.memory_space<vmem>>, %arg2: memref<128x128xf32, #tpu.memory_space<vmem>>, %arg3: memref<1x128xf32, #tpu.memory_space<vmem>>, %arg4: memref<128x128xf32, #tpu.memory_space<vmem>>, %arg5: memref<1x128xf32, #tpu.memory_space<vmem>>, %arg6: memref<128x128xf32, #tpu.memory_space<vmem>>, %arg7: memref<1x128xf32, #tpu.memory_space<vmem>>, %arg8: memref<128x256xf32, #tpu.memory_space<vmem>>, %arg9: memref<1x256xf32, #tpu.memory_space<vmem>>, %arg10: memref<8x128xf32, #tpu.memory_space<vmem>>) attributes {dimension_semantics = [], scalar_prefetch = 0 : i64, scratch_operands = 0 : i64, tpu.core_type = #tpu.core_type<tc>} {
    %c0 = arith.constant 0 : index
    %c0_0 = arith.constant 0 : index
    %0 = vector.load %arg0[%c0, %c0_0] : memref<8x128xf32, #tpu.memory_space<vmem>>, vector<8x128xf32>
    %c0_1 = arith.constant 0 : index
    %c0_2 = arith.constant 0 : index
    %1 = vector.load %arg2[%c0_1, %c0_2] : memref<128x128xf32, #tpu.memory_space<vmem>>, vector<128x128xf32>
    %cst = arith.constant dense<0.000000e+00> : vector<8x128xf32>
    %2 = tpu.matmul %0, %1, %cst {dimension_numbers = #tpu.dot_dimension_numbers<[1], [0], [0], [1], [0, 0, 1, 1], [], []>} : vector<8x128xf32>, vector<128x128xf32>, vector<8x128xf32> -> vector<8x128xf32>
    %c0_3 = arith.constant 0 : index
    %c0_4 = arith.constant 0 : index
    %3 = vector.load %arg3[%c0_3, %c0_4] : memref<1x128xf32, #tpu.memory_space<vmem>>, vector<1x128xf32>
    %4 = vector.broadcast %3 : vector<1x128xf32> to vector<8x128xf32>
    %5 = arith.addf %2, %4 : vector<8x128xf32>
    %cst_5 = arith.constant 0.000000e+00 : f32
    %6 = vector.broadcast %cst_5 : f32 to vector<8x128xf32>
    %7 = arith.maximumf %5, %6 : vector<8x128xf32>
    %c0_6 = arith.constant 0 : index
    %c0_7 = arith.constant 0 : index
    %8 = vector.load %arg4[%c0_6, %c0_7] : memref<128x128xf32, #tpu.memory_space<vmem>>, vector<128x128xf32>
    %cst_8 = arith.constant dense<0.000000e+00> : vector<8x128xf32>
    %9 = tpu.matmul %7, %8, %cst_8 {dimension_numbers = #tpu.dot_dimension_numbers<[1], [0], [0], [1], [0, 0, 1, 1], [], []>} : vector<8x128xf32>, vector<128x128xf32>, vector<8x128xf32> -> vector<8x128xf32>
    %c0_9 = arith.constant 0 : index
    %c0_10 = arith.constant 0 : index
    %10 = vector.load %arg5[%c0_9, %c0_10] : memref<1x128xf32, #tpu.memory_space<vmem>>, vector<1x128xf32>
    %11 = vector.broadcast %10 : vector<1x128xf32> to vector<8x128xf32>
    %12 = arith.addf %9, %11 : vector<8x128xf32>
    %cst_11 = arith.constant 0.000000e+00 : f32
    %13 = vector.broadcast %cst_11 : f32 to vector<8x128xf32>
    %14 = arith.maximumf %12, %13 : vector<8x128xf32>
    %c0_12 = arith.constant 0 : index
    %c0_13 = arith.constant 0 : index
    %15 = vector.load %arg6[%c0_12, %c0_13] : memref<128x128xf32, #tpu.memory_space<vmem>>, vector<128x128xf32>
    %cst_14 = arith.constant dense<0.000000e+00> : vector<8x128xf32>
    %16 = tpu.matmul %14, %15, %cst_14 {dimension_numbers = #tpu.dot_dimension_numbers<[1], [0], [0], [1], [0, 0, 1, 1], [], []>} : vector<8x128xf32>, vector<128x128xf32>, vector<8x128xf32> -> vector<8x128xf32>
    %c0_15 = arith.constant 0 : index
    %c0_16 = arith.constant 0 : index
    %17 = vector.load %arg7[%c0_15, %c0_16] : memref<1x128xf32, #tpu.memory_space<vmem>>, vector<1x128xf32>
    %18 = vector.broadcast %17 : vector<1x128xf32> to vector<8x128xf32>
    %19 = arith.addf %16, %18 : vector<8x128xf32>
    %cst_17 = arith.constant 0.000000e+00 : f32
    %20 = vector.broadcast %cst_17 : f32 to vector<8x128xf32>
    %21 = arith.maximumf %19, %20 : vector<8x128xf32>
    %c0_18 = arith.constant 0 : index
    %c0_19 = arith.constant 0 : index
    %22 = vector.load %arg8[%c0_18, %c0_19] : memref<128x256xf32, #tpu.memory_space<vmem>>, vector<128x256xf32>
    %cst_20 = arith.constant dense<0.000000e+00> : vector<8x256xf32>
    %23 = tpu.matmul %21, %22, %cst_20 {dimension_numbers = #tpu.dot_dimension_numbers<[1], [0], [0], [1], [0, 0, 1, 1], [], []>} : vector<8x128xf32>, vector<128x256xf32>, vector<8x256xf32> -> vector<8x256xf32>
    %c0_21 = arith.constant 0 : index
    %c0_22 = arith.constant 0 : index
    %24 = vector.load %arg9[%c0_21, %c0_22] : memref<1x256xf32, #tpu.memory_space<vmem>>, vector<1x256xf32>
    %25 = vector.broadcast %24 : vector<1x256xf32> to vector<8x256xf32>
    %26 = arith.addf %23, %25 : vector<8x256xf32>
    %27 = vector.extract_strided_slice %26 {offsets = [0, 0], sizes = [8, 128], strides = [1, 1]} : vector<8x256xf32> to vector<8x128xf32>
    %28 = vector.extract_strided_slice %26 {offsets = [0, 128], sizes = [8, 128], strides = [1, 1]} : vector<8x256xf32> to vector<8x128xf32>
    %cst_23 = arith.constant -2.000000e+01 : f32
    %cst_24 = arith.constant 2.000000e+00 : f32
    %29 = vector.broadcast %cst_23 : f32 to vector<8x128xf32>
    %30 = arith.maximumf %29, %28 : vector<8x128xf32>
    %31 = vector.broadcast %cst_24 : f32 to vector<8x128xf32>
    %32 = arith.minimumf %31, %30 : vector<8x128xf32>
    %33 = math.exp %32 : vector<8x128xf32>
    %c0_25 = arith.constant 0 : index
    %c0_26 = arith.constant 0 : index
    %34 = vector.load %arg1[%c0_25, %c0_26] : memref<8x128xf32, #tpu.memory_space<vmem>>, vector<8x128xf32>
    %35 = arith.mulf %33, %34 : vector<8x128xf32>
    %36 = arith.addf %27, %35 : vector<8x128xf32>
    %37 = math.tanh %36 : vector<8x128xf32>
    %c0_27 = arith.constant 0 : index
    %c0_28 = arith.constant 0 : index
    %38 = vector.load %arg10[%c0_27, %c0_28] : memref<8x128xf32, #tpu.memory_space<vmem>>, vector<8x128xf32>
    tpu.vector_store %arg10[%c0_27, %c0_28], %37 {strides = array<i32>} : memref<8x128xf32, #tpu.memory_space<vmem>>, vector<8x128xf32>,
    return
  }
}

</mosaic_0001>

<llo_original>
// kernel: tpu_custom_call.1
$region0: #{tpu_custom_call.1}
  #allocation0 [shape = 'u32[]', space=smem, size = 0x4, offset = 0x4, fixed_abs, tag = 'smem constant byte address 0x4 - core index']
  #allocation1 [shape = 'u32[144,128]{1,0:T(1,128)}', space=vmem, size = 0x12000, scoped, tag = 'internal scratch']
  %s0 = inlined_call_operand.hbm [shape: f32[8,128], index: 0, kind: input, shape index: {}]
  %s1 = inlined_call_operand.hbm [shape: f32[8,128], index: 1, kind: input, shape index: {}]
  %s2 = inlined_call_operand.hbm [shape: f32[128,128], index: 2, kind: input, shape index: {}]
  %s3 = inlined_call_operand.vmem [shape: f32[1,128], index: 3, kind: input, shape index: {}]
  %s4 = inlined_call_operand.hbm [shape: f32[128,128], index: 4, kind: input, shape index: {}]
  %s5 = inlined_call_operand.vmem [shape: f32[1,128], index: 5, kind: input, shape index: {}]
  %s6 = inlined_call_operand.hbm [shape: f32[128,128], index: 6, kind: input, shape index: {}]
  %s7 = inlined_call_operand.vmem [shape: f32[1,128], index: 7, kind: input, shape index: {}]
  %s8 = inlined_call_operand.hbm [shape: f32[128,256], index: 8, kind: input, shape index: {}]
  %s9 = inlined_call_operand.vmem [shape: f32[1,256], index: 9, kind: input, shape index: {}]
  %s10 = inlined_call_operand.hbm [shape: f32[8,128], index: 10, kind: output, shape index: {}]
  %s11 = sld [smem:[#allocation0]]
  $region74: #{tpu_custom_call.1} parent=0
    _
  %s13 = ssub.s32 1, %s11
  %s14 = scalar_select 0, %s13, %s11
  $region1: #{tpu_custom_call.1} parent=0
    #allocation2 [shape = 'u8[4096]{0}', space=vmem, size = 0x1000, scoped, tag = 'input window, operand 0, single buffered']
    #allocation3 [shape = 's32[1]{0}', space=sflag, size = 0x4, scoped, tag = 'scoped memory for tpu_custom_call.1']
    #allocation4 [shape = 's32[1]{0}', space=sflag, size = 0x4, scoped, tag = 'scoped memory for tpu_custom_call.1']
    #allocation5 [shape = 'u8[4096]{0}', space=vmem, size = 0x1000, scoped, tag = 'input window, operand 1, single buffered']
    #allocation6 [shape = 's32[1]{0}', space=sflag, size = 0x4, scoped, tag = 'scoped memory for tpu_custom_call.1']
    #allocation7 [shape = 'u8[65536]{0}', space=vmem, size = 0x10000, scoped, tag = 'input window, operand 2, single buffered']
    #allocation8 [shape = 'u8[65536]{0}', space=vmem, size = 0x10000, scoped, tag = 'input window, operand 4, single buffered']
    #allocation9 [shape = 's32[1]{0}', space=sflag, size = 0x4, scoped, tag = 'scoped memory for tpu_custom_call.1']
    #allocation10 [shape = 'u8[65536]{0}', space=vmem, size = 0x10000, scoped, tag = 'input window, operand 6, single buffered']
    #allocation11 [shape = 'u8[131072]{0}', space=vmem, size = 0x20000, scoped, tag = 'input window, operand 8, single buffered']
    #allocation12 [shape = 's32[1]{0}', space=sflag, size = 0x4, scoped, tag = 'scoped memory for tpu_custom_call.1']
    #allocation13 [shape = 'u8[4096]{0}', space=vmem, size = 0x1000, scoped, tag = 'output window, operand 0, single buffered']
    %15 = vsyncpa [#allocation3], 0
    %16 = vsyncpa [#allocation6], 0
    %17 = vsyncpa [#allocation9], 0
    %18 = vsyncpa [#allocation12], 0
    %19 = vsyncpa [#allocation4], 0
    // Predicated region
    $region2: #{tpu_custom_call.1} parent=1 // pred_check
      _
    $region3: #{tpu_custom_call.1} parent=1 // pred_check_branch
      %21 = sbr.rel (0) target = $region5
    $region4: #{tpu_custom_call.1} parent=1 // pred_region
      %s23 = ssub.s32 128, 128
      %24 = vsyncadd [#allocation3], %s23
      %s26 = sshll.u32 [#allocation2], 4
      %s27 = int_to_ptr.vmem [resolvable:$true] %s26
      %29 = dma.hbm_to_vmem [thread:$0]  %s0, 128, %s27, [#allocation3]
    $region5: #{tpu_custom_call.1} parent=1 // pred_fallthru
      _
    // Predicated region
    $region6: #{tpu_custom_call.1} parent=1 // pred_check
      _
    $region7: #{tpu_custom_call.1} parent=1 // pred_check_branch
      %31 = sbr.rel (0) target = $region9
    $region8: #{tpu_custom_call.1} parent=1 // pred_region
      %s33 = ssub.s32 128, 128
      %34 = vsyncadd [#allocation6], %s33
      %s36 = sshll.u32 [#allocation5], 4
      %s37 = int_to_ptr.vmem [resolvable:$true] %s36
      %39 = dma.hbm_to_vmem [thread:$0]  %s1, 128, %s37, [#allocation6]
    $region9: #{tpu_custom_call.1} parent=1 // pred_fallthru
      _
    // Predicated region
    $region10: #{tpu_custom_call.1} parent=1 // pred_check
      _
    $region11: #{tpu_custom_call.1} parent=1 // pred_check_branch
      %41 = sbr.rel (0) target = $region13
    $region12: #{tpu_custom_call.1} parent=1 // pred_region
      %s43 = ssub.s32 2048, 2048
      %44 = vsyncadd [#allocation6], %s43
      %s45 = sshll.u32 [#allocation7], 4
      %s46 = int_to_ptr.vmem [resolvable:$true] %s45
      %51 = dma.hbm_to_vmem [thread:$0]  %s2, 2048, %s46, [#allocation6], 128, 128, 8
    $region13: #{tpu_custom_call.1} parent=1 // pred_fallthru
      _
    // Predicated region
    $region14: #{tpu_custom_call.1} parent=1 // pred_check
      _
    $region15: #{tpu_custom_call.1} parent=1 // pred_check_branch
      %53 = sbr.rel (0) target = $region17
    $region16: #{tpu_custom_call.1} parent=1 // pred_region
      _
    $region17: #{tpu_custom_call.1} parent=1 // pred_fallthru
      _
    // Predicated region
    $region18: #{tpu_custom_call.1} parent=1 // pred_check
      _
    $region19: #{tpu_custom_call.1} parent=1 // pred_check_branch
      %55 = sbr.rel (0) target = $region21
    $region20: #{tpu_custom_call.1} parent=1 // pred_region
      %s57 = ssub.s32 2048, 2048
      %58 = vsyncadd [#allocation9], %s57
      %s59 = sshll.u32 [#allocation8], 4
      %s60 = int_to_ptr.vmem [resolvable:$true] %s59
      %65 = dma.hbm_to_vmem [thread:$0]  %s4, 2048, %s60, [#allocation9], 128, 128, 8
    $region21: #{tpu_custom_call.1} parent=1 // pred_fallthru
      _
    // Predicated region
    $region22: #{tpu_custom_call.1} parent=1 // pred_check
      _
    $region23: #{tpu_custom_call.1} parent=1 // pred_check_branch
      %67 = sbr.rel (0) target = $region25
    $region24: #{tpu_custom_call.1} parent=1 // pred_region
      _
    $region25: #{tpu_custom_call.1} parent=1 // pred_fallthru
      _
    // Predicated region
    $region26: #{tpu_custom_call.1} parent=1 // pred_check
      _
    $region27: #{tpu_custom_call.1} parent=1 // pred_check_branch
      %69 = sbr.rel (0) target = $region29
    $region28: #{tpu_custom_call.1} parent=1 // pred_region
      %s71 = ssub.s32 2048, 2048
      %72 = vsyncadd [#allocation9], %s71
      %s73 = sshll.u32 [#allocation10], 4
      %s74 = int_to_ptr.vmem [resolvable:$true] %s73
      %79 = dma.hbm_to_vmem [thread:$0]  %s6, 2048, %s74, [#allocation9], 128, 128, 8
    $region29: #{tpu_custom_call.1} parent=1 // pred_fallthru
      _
    // Predicated region
    $region30: #{tpu_custom_call.1} parent=1 // pred_check
      _
    $region31: #{tpu_custom_call.1} parent=1 // pred_check_branch
      %81 = sbr.rel (0) target = $region33
    $region32: #{tpu_custom_call.1} parent=1 // pred_region
      _
    $region33: #{tpu_custom_call.1} parent=1 // pred_fallthru
      _
    // Predicated region
    $region34: #{tpu_custom_call.1} parent=1 // pred_check
      _
    $region35: #{tpu_custom_call.1} parent=1 // pred_check_branch
      %83 = sbr.rel (0) target = $region37
    $region36: #{tpu_custom_call.1} parent=1 // pred_region
      %s85 = ssub.s32 4096, 4096
      %86 = vsyncadd [#allocation12], %s85
      %s87 = sshll.u32 [#allocation11], 4
      %s88 = int_to_ptr.vmem [resolvable:$true] %s87
      %93 = dma.hbm_to_vmem [thread:$0]  %s8, 4096, %s88, [#allocation12], 256, 256, 16
    $region37: #{tpu_custom_call.1} parent=1 // pred_fallthru
      _
    // Predicated region
    $region38: #{tpu_custom_call.1} parent=1 // pred_check
      _
    $region39: #{tpu_custom_call.1} parent=1 // pred_check_branch
      %95 = sbr.rel (0) target = $region41
    $region40: #{tpu_custom_call.1} parent=1 // pred_region
      _
    $region41: #{tpu_custom_call.1} parent=1 // pred_fallthru
      _
    // Predicated region
    $region42: #{tpu_custom_call.1} parent=1 // pred_check
      _
    $region43: #{tpu_custom_call.1} parent=1 // pred_check_branch
      %97 = sbr.rel (0) target = $region45
    $region44: #{tpu_custom_call.1} parent=1 // pred_region
      %98 = dma.done [#allocation3], 128
    $region45: #{tpu_custom_call.1} parent=1 // pred_fallthru
      _
    // Predicated region
    $region46: #{tpu_custom_call.1} parent=1 // pred_check
      _
    $region47: #{tpu_custom_call.1} parent=1 // pred_check_branch
      %100 = sbr.rel (0) target = $region49
    $region48: #{tpu_custom_call.1} parent=1 // pred_region
      %101 = dma.done [#allocation6], 128
    $region49: #{tpu_custom_call.1} parent=1 // pred_fallthru
      _
    // Predicated region
    $region50: #{tpu_custom_call.1} parent=1 // pred_check
      _
    $region51: #{tpu_custom_call.1} parent=1 // pred_check_branch
      %103 = sbr.rel (0) target = $region53
    $region52: #{tpu_custom_call.1} parent=1 // pred_region
      %104 = dma.done [#allocation6], 2048
    $region53: #{tpu_custom_call.1} parent=1 // pred_fallthru
      _
    // Predicated region
    $region54: #{tpu_custom_call.1} parent=1 // pred_check
      _
    $region55: #{tpu_custom_call.1} parent=1 // pred_check_branch
      %106 = sbr.rel (0) target = $region57
    $region56: #{tpu_custom_call.1} parent=1 // pred_region
      %107 = dma.done [#allocation9], 2048
    $region57: #{tpu_custom_call.1} parent=1 // pred_fallthru
      _
    // Predicated region
    $region58: #{tpu_custom_call.1} parent=1 // pred_check
      _
    $region59: #{tpu_custom_call.1} parent=1 // pred_check_branch
      %109 = sbr.rel (0) target = $region61
    $region60: #{tpu_custom_call.1} parent=1 // pred_region
      %110 = dma.done [#allocation9], 2048
    $region61: #{tpu_custom_call.1} parent=1 // pred_fallthru
      _
    // Predicated region
    $region62: #{tpu_custom_call.1} parent=1 // pred_check
      _
    $region63: #{tpu_custom_call.1} parent=1 // pred_check_branch
      %112 = sbr.rel (0) target = $region65
    $region64: #{tpu_custom_call.1} parent=1 // pred_region
      %113 = dma.done [#allocation12], 4096
    $region65: #{tpu_custom_call.1} parent=1 // pred_fallthru
      _
    %v114 = vld [vmem:[#allocation2] sm:$0xff]
    %v115 = vld [vmem:[#allocation7] sm:$0xff]
    %v116 = vld [vmem:[#allocation7 + $0x8] sm:$0xff]
    %v117 = vld [vmem:[#allocation7 + $0x10] sm:$0xff]
    %v118 = vld [vmem:[#allocation7 + $0x18] sm:$0xff]
    %v119 = vld [vmem:[#allocation7 + $0x20] sm:$0xff]
    %v120 = vld [vmem:[#allocation7 + $0x28] sm:$0xff]
    %v121 = vld [vmem:[#allocation7 + $0x30] sm:$0xff]
    %v122 = vld [vmem:[#allocation7 + $0x38] sm:$0xff]
    %v123 = vld [vmem:[#allocation7 + $0x40] sm:$0xff]
    %v124 = vld [vmem:[#allocation7 + $0x48] sm:$0xff]
    %v125 = vld [vmem:[#allocation7 + $0x50] sm:$0xff]
    %v126 = vld [vmem:[#allocation7 + $0x58] sm:$0xff]
    %v127 = vld [vmem:[#allocation7 + $0x60] sm:$0xff]
    %v128 = vld [vmem:[#allocation7 + $0x68] sm:$0xff]
    %v129 = vld [vmem:[#allocation7 + $0x70] sm:$0xff]
    %v130 = vld [vmem:[#allocation7 + $0x78] sm:$0xff]
    %v131 = vld [vmem:[%s3] sm:$0x1]
    %v133 = vlaneseq
    %v134 = vshrl.u32 %v133, 7
    %v135 = vsub.s32 0, %v134
    %v136 = vrot.slane %v131, %v135
    %138 = vmatprep.subr.mxu0 0.0
    %139 = vmatpush1.msra.mxu0 %v115
    %140 = vmatprep.subr.mxu0 0.0
    %141 = vmatpush1.msra.mxu0 %v116
    %142 = vmatprep.subr.mxu0 0.0
    %143 = vmatpush1.msra.mxu0 %v117
    %144 = vmatprep.subr.mxu0 0.0
    %145 = vmatpush1.msra.mxu0 %v118
    %146 = vmatprep.subr.mxu0 0.0
    %147 = vmatpush1.msra.mxu0 %v119
    %148 = vmatprep.subr.mxu0 0.0
    %149 = vmatpush1.msra.mxu0 %v120
    %150 = vmatprep.subr.mxu0 0.0
    %151 = vmatpush1.msra.mxu0 %v121
    %152 = vmatprep.subr.mxu0 0.0
    %153 = vmatpush1.msra.mxu0 %v122
    %154 = vmatprep.subr.mxu0 0.0
    %155 = vmatpush1.msra.mxu0 %v123
    %156 = vmatprep.subr.mxu0 0.0
    %157 = vmatpush1.msra.mxu0 %v124
    %158 = vmatprep.subr.mxu0 0.0
    %159 = vmatpush1.msra.mxu0 %v125
    %160 = vmatprep.subr.mxu0 0.0
    %161 = vmatpush1.msra.mxu0 %v126
    %162 = vmatprep.subr.mxu0 0.0
    %163 = vmatpush1.msra.mxu0 %v127
    %164 = vmatprep.subr.mxu0 0.0
    %165 = vmatpush1.msra.mxu0 %v128
    %166 = vmatprep.subr.mxu0 0.0
    %167 = vmatpush1.msra.mxu0 %v129
    %168 = vmatprep.subr.mxu0 0.0
    %169 = vmatpush1.msra.mxu0 %v130
    %170 = vmatprep.subr.mxu0 0.0
    %171 = vmatpush1.msra.mxu0 0.0
    %172 = vmatprep.subr.mxu0 0.0
    %173 = vmatpush1.msra.mxu0 0.0
    %174 = vmatprep.subr.mxu0 0.0
    %175 = vmatpush1.msra.mxu0 0.0
    %176 = vmatprep.subr.mxu0 0.0
    %177 = vmatpush1.msra.mxu0 0.0
    %178 = vmatprep.subr.mxu0 0.0
    %179 = vmatpush1.msra.mxu0 0.0
    %180 = vmatprep.subr.mxu0 0.0
    %181 = vmatpush1.msra.mxu0 0.0
    %182 = vmatprep.subr.mxu0 0.0
    %183 = vmatpush1.msra.mxu0 0.0
    %184 = vmatprep.subr.mxu0 0.0
    %185 = vmatpush1.msra.mxu0 0.0
    %186 = vmatprep.subr.mxu0 0.0
    %187 = vmatpush1.msra.mxu0 0.0
    %188 = vmatprep.subr.mxu0 0.0
    %189 = vmatpush1.msra.mxu0 0.0
    %190 = vmatprep.subr.mxu0 0.0
    %191 = vmatpush1.msra.mxu0 0.0
    %192 = vmatprep.subr.mxu0 0.0
    %193 = vmatpush1.msra.mxu0 0.0
    %194 = vmatprep.subr.mxu0 0.0
    %195 = vmatpush1.msra.mxu0 0.0
    %196 = vmatprep.subr.mxu0 0.0
    %197 = vmatpush1.msra.mxu0 0.0
    %198 = vmatprep.subr.mxu0 0.0
    %199 = vmatpush1.msra.mxu0 0.0
    %200 = vmatprep.subr.mxu0 0.0
    %201 = vmatpush1.msra.mxu0 0.0
    %202 = vmatprep.mubr.f32.mxu0 0.0
    %203 = vmatmul.mubr.f32.gmra.mrb[0].mxu0 %v114
    %v204 = vpop.f32.mrb[0].mxu0
    %v205 = vadd.f32 %v136, %v204
    %v206 = vpop.f32.mrb[0].mxu0
    %207 = vdwg.mxu0
    %v208 = vmax.f32 %v205, 0.0
    %v209 = vld [vmem:[#allocation8] sm:$0xff]
    %v210 = vld [vmem:[#allocation8 + $0x8] sm:$0xff]
    %v211 = vld [vmem:[#allocation8 + $0x10] sm:$0xff]
    %v212 = vld [vmem:[#allocation8 + $0x18] sm:$0xff]
    %v213 = vld [vmem:[#allocation8 + $0x20] sm:$0xff]
    %v214 = vld [vmem:[#allocation8 + $0x28] sm:$0xff]
    %v215 = vld [vmem:[#allocation8 + $0x30] sm:$0xff]
    %v216 = vld [vmem:[#allocation8 + $0x38] sm:$0xff]
    %v217 = vld [vmem:[#allocation8 + $0x40] sm:$0xff]
    %v218 = vld [vmem:[#allocation8 + $0x48] sm:$0xff]
    %v219 = vld [vmem:[#allocation8 + $0x50] sm:$0xff]
    %v220 = vld [vmem:[#allocation8 + $0x58] sm:$0xff]
    %v221 = vld [vmem:[#allocation8 + $0x60] sm:$0xff]
    %v222 = vld [vmem:[#allocation8 + $0x68] sm:$0xff]
    %v223 = vld [vmem:[#allocation8 + $0x70] sm:$0xff]
    %v224 = vld [vmem:[#allocation8 + $0x78] sm:$0xff]
    %v225 = vld [vmem:[%s5] sm:$0x1]
    %v227 = vlaneseq
    %v228 = vshrl.u32 %v227, 7
    %v229 = vsub.s32 0, %v228
    %v230 = vrot.slane %v225, %v229
    %232 = vmatprep.subr.mxu0 0.0
    %233 = vmatpush1.msra.mxu0 %v209
    %234 = vmatprep.subr.mxu0 0.0
    %235 = vmatpush1.msra.mxu0 %v210
    %236 = vmatprep.subr.mxu0 0.0
    %237 = vmatpush1.msra.mxu0 %v211
    %238 = vmatprep.subr.mxu0 0.0
    %239 = vmatpush1.msra.mxu0 %v212
    %240 = vmatprep.subr.mxu0 0.0
    %241 = vmatpush1.msra.mxu0 %v213
    %242 = vmatprep.subr.mxu0 0.0
    %243 = vmatpush1.msra.mxu0 %v214
    %244 = vmatprep.subr.mxu0 0.0
    %245 = vmatpush1.msra.mxu0 %v215
    %246 = vmatprep.subr.mxu0 0.0
    %247 = vmatpush1.msra.mxu0 %v216
    %248 = vmatprep.subr.mxu0 0.0
    %249 = vmatpush1.msra.mxu0 %v217
    %250 = vmatprep.subr.mxu0 0.0
    %251 = vmatpush1.msra.mxu0 %v218
    %252 = vmatprep.subr.mxu0 0.0
    %253 = vmatpush1.msra.mxu0 %v219
    %254 = vmatprep.subr.mxu0 0.0
    %255 = vmatpush1.msra.mxu0 %v220
    %256 = vmatprep.subr.mxu0 0.0
    %257 = vmatpush1.msra.mxu0 %v221
    %258 = vmatprep.subr.mxu0 0.0
    %259 = vmatpush1.msra.mxu0 %v222
    %260 = vmatprep.subr.mxu0 0.0
    %261 = vmatpush1.msra.mxu0 %v223
    %262 = vmatprep.subr.mxu0 0.0
    %263 = vmatpush1.msra.mxu0 %v224
    %264 = vmatprep.subr.mxu0 0.0
    %265 = vmatpush1.msra.mxu0 0.0
    %266 = vmatprep.subr.mxu0 0.0
    %267 = vmatpush1.msra.mxu0 0.0
    %268 = vmatprep.subr.mxu0 0.0
    %269 = vmatpush1.msra.mxu0 0.0
    %270 = vmatprep.subr.mxu0 0.0
    %271 = vmatpush1.msra.mxu0 0.0
    %272 = vmatprep.subr.mxu0 0.0
    %273 = vmatpush1.msra.mxu0 0.0
    %274 = vmatprep.subr.mxu0 0.0
    %275 = vmatpush1.msra.mxu0 0.0
    %276 = vmatprep.subr.mxu0 0.0
    %277 = vmatpush1.msra.mxu0 0.0
    %278 = vmatprep.subr.mxu0 0.0
    %279 = vmatpush1.msra.mxu0 0.0
    %280 = vmatprep.subr.mxu0 0.0
    %281 = vmatpush1.msra.mxu0 0.0
    %282 = vmatprep.subr.mxu0 0.0
    %283 = vmatpush1.msra.mxu0 0.0
    %284 = vmatprep.subr.mxu0 0.0
    %285 = vmatpush1.msra.mxu0 0.0
    %286 = vmatprep.subr.mxu0 0.0
    %287 = vmatpush1.msra.mxu0 0.0
    %288 = vmatprep.subr.mxu0 0.0
    %289 = vmatpush1.msra.mxu0 0.0
    %290 = vmatprep.subr.mxu0 0.0
    %291 = vmatpush1.msra.mxu0 0.0
    %292 = vmatprep.subr.mxu0 0.0
    %293 = vmatpush1.msra.mxu0 0.0
    %294 = vmatprep.subr.mxu0 0.0
    %295 = vmatpush1.msra.mxu0 0.0
    %296 = vmatprep.mubr.f32.mxu0 0.0
    %297 = vmatmul.mubr.f32.gmra.mrb[0].mxu0 %v208
    %v298 = vpop.f32.mrb[0].mxu0
    %v299 = vadd.f32 %v230, %v298
    %v300 = vpop.f32.mrb[0].mxu0
    %301 = vdwg.mxu0
    %v302 = vmax.f32 %v299, 0.0
    %v303 = vld [vmem:[#allocation10] sm:$0xff]
    %v304 = vld [vmem:[#allocation10 + $0x8] sm:$0xff]
    %v305 = vld [vmem:[#allocation10 + $0x10] sm:$0xff]
    %v306 = vld [vmem:[#allocation10 + $0x18] sm:$0xff]
    %v307 = vld [vmem:[#allocation10 + $0x20] sm:$0xff]
    %v308 = vld [vmem:[#allocation10 + $0x28] sm:$0xff]
    %v309 = vld [vmem:[#allocation10 + $0x30] sm:$0xff]
    %v310 = vld [vmem:[#allocation10 + $0x38] sm:$0xff]
    %v311 = vld [vmem:[#allocation10 + $0x40] sm:$0xff]
    %v312 = vld [vmem:[#allocation10 + $0x48] sm:$0xff]
    %v313 = vld [vmem:[#allocation10 + $0x50] sm:$0xff]
    %v314 = vld [vmem:[#allocation10 + $0x58] sm:$0xff]
    %v315 = vld [vmem:[#allocation10 + $0x60] sm:$0xff]
    %v316 = vld [vmem:[#allocation10 + $0x68] sm:$0xff]
    %v317 = vld [vmem:[#allocation10 + $0x70] sm:$0xff]
    %v318 = vld [vmem:[#allocation10 + $0x78] sm:$0xff]
    %v319 = vld [vmem:[%s7] sm:$0x1]
    %v321 = vlaneseq
    %v322 = vshrl.u32 %v321, 7
    %v323 = vsub.s32 0, %v322
    %v324 = vrot.slane %v319, %v323
    %326 = vmatprep.subr.mxu0 0.0
    %327 = vmatpush1.msra.mxu0 %v303
    %328 = vmatprep.subr.mxu0 0.0
    %329 = vmatpush1.msra.mxu0 %v304
    %330 = vmatprep.subr.mxu0 0.0
    %331 = vmatpush1.msra.mxu0 %v305
    %332 = vmatprep.subr.mxu0 0.0
    %333 = vmatpush1.msra.mxu0 %v306
    %334 = vmatprep.subr.mxu0 0.0
    %335 = vmatpush1.msra.mxu0 %v307
    %336 = vmatprep.subr.mxu0 0.0
    %337 = vmatpush1.msra.mxu0 %v308
    %338 = vmatprep.subr.mxu0 0.0
    %339 = vmatpush1.msra.mxu0 %v309
    %340 = vmatprep.subr.mxu0 0.0
    %341 = vmatpush1.msra.mxu0 %v310
    %342 = vmatprep.subr.mxu0 0.0
    %343 = vmatpush1.msra.mxu0 %v311
    %344 = vmatprep.subr.mxu0 0.0
    %345 = vmatpush1.msra.mxu0 %v312
    %346 = vmatprep.subr.mxu0 0.0
    %347 = vmatpush1.msra.mxu0 %v313
    %348 = vmatprep.subr.mxu0 0.0
    %349 = vmatpush1.msra.mxu0 %v314
    %350 = vmatprep.subr.mxu0 0.0
    %351 = vmatpush1.msra.mxu0 %v315
    %352 = vmatprep.subr.mxu0 0.0
    %353 = vmatpush1.msra.mxu0 %v316
    %354 = vmatprep.subr.mxu0 0.0
    %355 = vmatpush1.msra.mxu0 %v317
    %356 = vmatprep.subr.mxu0 0.0
    %357 = vmatpush1.msra.mxu0 %v318
    %358 = vmatprep.subr.mxu0 0.0
    %359 = vmatpush1.msra.mxu0 0.0
    %360 = vmatprep.subr.mxu0 0.0
    %361 = vmatpush1.msra.mxu0 0.0
    %362 = vmatprep.subr.mxu0 0.0
    %363 = vmatpush1.msra.mxu0 0.0
    %364 = vmatprep.subr.mxu0 0.0
    %365 = vmatpush1.msra.mxu0 0.0
    %366 = vmatprep.subr.mxu0 0.0
    %367 = vmatpush1.msra.mxu0 0.0
    %368 = vmatprep.subr.mxu0 0.0
    %369 = vmatpush1.msra.mxu0 0.0
    %370 = vmatprep.subr.mxu0 0.0
    %371 = vmatpush1.msra.mxu0 0.0
    %372 = vmatprep.subr.mxu0 0.0
    %373 = vmatpush1.msra.mxu0 0.0
    %374 = vmatprep.subr.mxu0 0.0
    %375 = vmatpush1.msra.mxu0 0.0
    %376 = vmatprep.subr.mxu0 0.0
    %377 = vmatpush1.msra.mxu0 0.0
    %378 = vmatprep.subr.mxu0 0.0
    %379 = vmatpush1.msra.mxu0 0.0
    %380 = vmatprep.subr.mxu0 0.0
    %381 = vmatpush1.msra.mxu0 0.0
    %382 = vmatprep.subr.mxu0 0.0
    %383 = vmatpush1.msra.mxu0 0.0
    %384 = vmatprep.subr.mxu0 0.0
    %385 = vmatpush1.msra.mxu0 0.0
    %386 = vmatprep.subr.mxu0 0.0
    %387 = vmatpush1.msra.mxu0 0.0
    %388 = vmatprep.subr.mxu0 0.0
    %389 = vmatpush1.msra.mxu0 0.0
    %390 = vmatprep.mubr.f32.mxu0 0.0
    %391 = vmatmul.mubr.f32.gmra.mrb[0].mxu0 %v302
    %v392 = vpop.f32.mrb[0].mxu0
    %v393 = vadd.f32 %v324, %v392
    %v394 = vpop.f32.mrb[0].mxu0
    %395 = vdwg.mxu0
    %v396 = vmax.f32 %v393, 0.0
    %v397 = vld [vmem:[#allocation11] sm:$0xff]
    %v398 = vld [vmem:[#allocation11 + $0x8] sm:$0xff]
    %v399 = vld [vmem:[#allocation11 + $0x10] sm:$0xff]
    %v400 = vld [vmem:[#allocation11 + $0x18] sm:$0xff]
    %v401 = vld [vmem:[#allocation11 + $0x20] sm:$0xff]
    %v402 = vld [vmem:[#allocation11 + $0x28] sm:$0xff]
    %v403 = vld [vmem:[#allocation11 + $0x30] sm:$0xff]
    %v404 = vld [vmem:[#allocation11 + $0x38] sm:$0xff]
    %v405 = vld [vmem:[#allocation11 + $0x40] sm:$0xff]
    %v406 = vld [vmem:[#allocation11 + $0x48] sm:$0xff]
    %v407 = vld [vmem:[#allocation11 + $0x50] sm:$0xff]
    %v408 = vld [vmem:[#allocation11 + $0x58] sm:$0xff]
    %v409 = vld [vmem:[#allocation11 + $0x60] sm:$0xff]
    %v410 = vld [vmem:[#allocation11 + $0x68] sm:$0xff]
    %v411 = vld [vmem:[#allocation11 + $0x70] sm:$0xff]
    %v412 = vld [vmem:[#allocation11 + $0x78] sm:$0xff]
    %v413 = vld [vmem:[#allocation11 + $0x80] sm:$0xff]
    %v414 = vld [vmem:[#allocation11 + $0x88] sm:$0xff]
    %v415 = vld [vmem:[#allocation11 + $0x90] sm:$0xff]
    %v416 = vld [vmem:[#allocation11 + $0x98] sm:$0xff]
    %v417 = vld [vmem:[#allocation11 + $0xa0] sm:$0xff]
    %v418 = vld [vmem:[#allocation11 + $0xa8] sm:$0xff]
    %v419 = vld [vmem:[#allocation11 + $0xb0] sm:$0xff]
    %v420 = vld [vmem:[#allocation11 + $0xb8] sm:$0xff]
    %v421 = vld [vmem:[#allocation11 + $0xc0] sm:$0xff]
    %v422 = vld [vmem:[#allocation11 + $0xc8] sm:$0xff]
    %v423 = vld [vmem:[#allocation11 + $0xd0] sm:$0xff]
    %v424 = vld [vmem:[#allocation11 + $0xd8] sm:$0xff]
    %v425 = vld [vmem:[#allocation11 + $0xe0] sm:$0xff]
    %v426 = vld [vmem:[#allocation11 + $0xe8] sm:$0xff]
    %v427 = vld [vmem:[#allocation11 + $0xf0] sm:$0xff]
    %v428 = vld [vmem:[#allocation11 + $0xf8] sm:$0xff]
    %v429 = vld [vmem:[%s9] sm:$0x3]
    %v431 = vlaneseq
    %v432 = vshrl.u32 %v431, 7
    %v433 = vsub.s32 0, %v432
    %v434 = vrot.slane %v429, %v433
    %v435 = vlaneseq
    %v436 = vshrl.u32 %v435, 7
    %v437 = vsub.s32 1, %v436
    %v438 = vrot.slane %v429, %v437
    %441 = vmatprep.subr.mxu0 %v398
    %442 = vmatpush1.msra.mxu0 %v397
    %443 = vmatprep.subr.mxu0 %v400
    %444 = vmatpush1.msra.mxu0 %v399
    %445 = vmatprep.subr.mxu0 %v402
    %446 = vmatpush1.msra.mxu0 %v401
    %447 = vmatprep.subr.mxu0 %v404
    %448 = vmatpush1.msra.mxu0 %v403
    %449 = vmatprep.subr.mxu0 %v406
    %450 = vmatpush1.msra.mxu0 %v405
    %451 = vmatprep.subr.mxu0 %v408
    %452 = vmatpush1.msra.mxu0 %v407
    %453 = vmatprep.subr.mxu0 %v410
    %454 = vmatpush1.msra.mxu0 %v409
    %455 = vmatprep.subr.mxu0 %v412
    %456 = vmatpush1.msra.mxu0 %v411
    %457 = vmatprep.subr.mxu0 %v414
    %458 = vmatpush1.msra.mxu0 %v413
    %459 = vmatprep.subr.mxu0 %v416
    %460 = vmatpush1.msra.mxu0 %v415
    %461 = vmatprep.subr.mxu0 %v418
    %462 = vmatpush1.msra.mxu0 %v417
    %463 = vmatprep.subr.mxu0 %v420
    %464 = vmatpush1.msra.mxu0 %v419
    %465 = vmatprep.subr.mxu0 %v422
    %466 = vmatpush1.msra.mxu0 %v421
    %467 = vmatprep.subr.mxu0 %v424
    %468 = vmatpush1.msra.mxu0 %v423
    %469 = vmatprep.subr.mxu0 %v426
    %470 = vmatpush1.msra.mxu0 %v425
    %471 = vmatprep.subr.mxu0 %v428
    %472 = vmatpush1.msra.mxu0 %v427
    %473 = vmatprep.subr.mxu0 0.0
    %474 = vmatpush1.msra.mxu0 0.0
    %475 = vmatprep.subr.mxu0 0.0
    %476 = vmatpush1.msra.mxu0 0.0
    %477 = vmatprep.subr.mxu0 0.0
    %478 = vmatpush1.msra.mxu0 0.0
    %479 = vmatprep.subr.mxu0 0.0
    %480 = vmatpush1.msra.mxu0 0.0
    %481 = vmatprep.subr.mxu0 0.0
    %482 = vmatpush1.msra.mxu0 0.0
    %483 = vmatprep.subr.mxu0 0.0
    %484 = vmatpush1.msra.mxu0 0.0
    %485 = vmatprep.subr.mxu0 0.0
    %486 = vmatpush1.msra.mxu0 0.0
    %487 = vmatprep.subr.mxu0 0.0
    %488 = vmatpush1.msra.mxu0 0.0
    %489 = vmatprep.subr.mxu0 0.0
    %490 = vmatpush1.msra.mxu0 0.0
    %491 = vmatprep.subr.mxu0 0.0
    %492 = vmatpush1.msra.mxu0 0.0
    %493 = vmatprep.subr.mxu0 0.0
    %494 = vmatpush1.msra.mxu0 0.0
    %495 = vmatprep.subr.mxu0 0.0
    %496 = vmatpush1.msra.mxu0 0.0
    %497 = vmatprep.subr.mxu0 0.0
    %498 = vmatpush1.msra.mxu0 0.0
    %499 = vmatprep.subr.mxu0 0.0
    %500 = vmatpush1.msra.mxu0 0.0
    %501 = vmatprep.subr.mxu0 0.0
    %502 = vmatpush1.msra.mxu0 0.0
    %503 = vmatprep.subr.mxu0 0.0
    %504 = vmatpush1.msra.mxu0 0.0
    %505 = vmatprep.mubr.f32.mxu0 0.0
    %506 = vmatmul.mubr.f32.gmra.mrb[0].mxu0 %v396
    %v507 = vpop.f32.mrb[0].mxu0
    %v508 = vadd.f32 %v434, %v507
    %v509 = vpop.f32.mrb[0].mxu0
    %v510 = vadd.f32 %v438, %v509
    %511 = vdwg.mxu0
    %v512 = vmax.f32 %v510, -20.0
    %v513 = vmin.f32 %v512, 2.0
    %v514 = vmul.f32 %v513, 1.442695
    %v515 = vpow.pop %v514
    %v516 = vld [vmem:[#allocation5] sm:$0xff]
    %v517 = vmul.f32 %v515, %v516
    %v518 = vadd.f32 %v508, %v517
    %v519 = vtanh.pop %v518
    %520 = vst [vmem:[#allocation13] sm:$0xff] %v519
    // Predicated region
    $region66: #{tpu_custom_call.1} parent=1 // pred_check
      _
    $region67: #{tpu_custom_call.1} parent=1 // pred_check_branch
      %522 = sbr.rel (0) target = $region69
    $region68: #{tpu_custom_call.1} parent=1 // pred_region
      %s524 = ssub.s32 128, 128
      %525 = vsyncadd [#allocation4], %s524
      %s527 = sshll.u32 [#allocation13], 4
      %s528 = int_to_ptr.vmem [resolvable:$true] %s527
      %530 = dma.vmem_to_hbm [thread:$0]  %s528, 128, %s10, [#allocation4]
    $region69: #{tpu_custom_call.1} parent=1 // pred_fallthru
      _
    // Predicated region
    $region70: #{tpu_custom_call.1} parent=1 // pred_check
      _
    $region71: #{tpu_custom_call.1} parent=1 // pred_check_branch
      %532 = sbr.rel (0) target = $region73
    $region72: #{tpu_custom_call.1} parent=1 // pred_region
      %533 = dma.done [#allocation4], 128
    $region73: #{tpu_custom_call.1} parent=1 // pred_fallthru
      _
    %534 = vsyncpa [#allocation3], 1
    %535 = vsyncpa [#allocation6], 1
    %536 = vsyncpa [#allocation9], 1
    %537 = vsyncpa [#allocation12], 1
    %538 = vsyncpa [#allocation4], 1

</llo_original>
